<compile_context>
chip_gen: v6e
topology: v6e:2x2x1
jax: 0.10.0
libtpu: 0.0.40
codegen_flags: <defaults>
</compile_context>

<pallas_src>
import jax
import jax.numpy as jnp
from jax.experimental import pallas as pl
from jax.experimental.pallas import tpu as pltpu


def _copy_kernel(x_ref, o_ref):
    # Pure data movement: one lane-dense tile in, one tile out (unmasked vst).
    o_ref[...] = x_ref[...]


# Sublane multiple per element size so tiles stay full-vreg for any dtype
# (f32 -> 8, bf16 -> 16, int8/fp8 -> 32).
_SUBLANE = {4: 8, 2: 16, 1: 32}


def _materialize_flat(flat):
    """Tiled Pallas copy of a flat 1-D array (the 'compute' of ReshapeDim)."""
    n = flat.shape[0]
    dtype = flat.dtype
    itemsize = jnp.dtype(dtype).itemsize
    sub = _SUBLANE.get(itemsize, 8)

    # Pick a lane-dense 2-D slab (rows, lane): lane a large multiple of 128,
    # rows a multiple of the per-dtype sublane count.
    lane = 0
    for cand in (2048, 1024, 512, 256, 128):
        if n % cand == 0 and (n // cand) % sub == 0:
            lane = cand
            break

    if lane == 0:
        # Awkward / tiny total size: a single full-array block is always legal
        # (block_shape == full dims).  No grid, whole array in VMEM.
        x2d = jnp.reshape(flat, (1, n))
        out2d = pl.pallas_call(
            _copy_kernel,
            out_shape=jax.ShapeDtypeStruct((1, n), dtype),
        )(x2d)
        return jnp.reshape(out2d, (n,))

    rows = n // lane
    # Largest block row-count that divides `rows`, is a multiple of `sub`, and
    # keeps a single buffer <= ~4 MiB.  With double-buffered input + output
    # that is <= 16 MiB live VMEM, safe on v7x's 64 MiB as well as v5e/v6e.
    max_block_rows = max(sub, (4 * 1024 * 1024 // itemsize) // lane)
    block_rows = sub
    for cand in (sub * m for m in (512, 256, 128, 64, 32, 16, 8, 4, 2, 1)):
        if cand <= rows and cand <= max_block_rows and rows % cand == 0:
            block_rows = cand
            break

    grid = (rows // block_rows,)
    x2d = jnp.reshape(flat, (rows, lane))
    out2d = pl.pallas_call(
        _copy_kernel,
        out_shape=jax.ShapeDtypeStruct((rows, lane), dtype),
        grid_spec=pltpu.PrefetchScalarGridSpec(
            num_scalar_prefetch=0,
            grid=grid,
            in_specs=[pl.BlockSpec((block_rows, lane), lambda i: (i, 0))],
            out_specs=pl.BlockSpec((block_rows, lane), lambda i: (i, 0)),
        ),
        compiler_params=pltpu.CompilerParams(
            # "parallel" lets the grid shard across the 2 TensorCores on v7x;
            # it is not relied on as a perf lever otherwise.
            dimension_semantics=("parallel",),
            # Covers 2 buffers x (in + out) x 4 MiB with headroom; also raises
            # v5e's 16 MiB default scoped limit.
            vmem_limit_bytes=32 * 1024 * 1024,
        ),
    )(x2d)
    return jnp.reshape(out2d, (n,))


def reshape_dim(x, *shape, dim=0):
    """JAX/Pallas equivalent of ReshapeDim(*shape, dim=dim)(x)."""
    in_shape = tuple(x.shape)
    # Mirror the PyTorch module verbatim (including its negative-`dim` slicing
    # behaviour): shape[:dim] + self.shape + shape[dim + 1:]
    target = in_shape[:dim] + tuple(shape) + in_shape[dim + 1:]

    # The reshape itself is metadata-only (row-major), identical to
    # torch.reshape — no kernel needed for the shape change.
    x_r = jnp.reshape(x, target)
    out_shape = x_r.shape
    n = x_r.size
    if n == 0:
        return x_r  # empty array: nothing to copy, skip the kernel entirely.

    flat = jnp.reshape(x_r, (n,))
    out_flat = _materialize_flat(flat)
    return jnp.reshape(out_flat, out_shape)


if __name__ == "__main__":
    key = jax.random.PRNGKey(0)
    # NCHW activation: (B, C, H, W) = (2, 4, 16, 16)
    x = jax.random.normal(key, (2, 4, 16, 16), dtype=jnp.float32)

    # ReshapeDim(2, 2, dim=1): split the channel axis 4 -> (2, 2)
    out = reshape_dim(x, 2, 2, dim=1)
    out = jax.block_until_ready(out)
    ref = jnp.reshape(x, (2, 2, 2, 16, 16))
    assert out.shape == (2, 2, 2, 16, 16), out.shape
    assert out.dtype == x.dtype
    assert bool(jnp.all(out == ref))

    # ReshapeDim(4, 4, dim=3): split the width axis 16 -> (4, 4)
    out2 = reshape_dim(x, 4, 4, dim=3)
    out2 = jax.block_until_ready(out2)
    ref2 = jnp.reshape(x, (2, 4, 16, 4, 4))
    assert out2.shape == (2, 4, 16, 4, 4), out2.shape
    assert bool(jnp.all(out2 == ref2))

    # Oddly-sized input exercises the single-block fallback path.
    x_odd = jax.random.normal(key, (3, 5, 7), dtype=jnp.float32)
    out3 = reshape_dim(x_odd, 1, 5, dim=1)  # (3, 1, 5, 7)
    out3 = jax.block_until_ready(out3)
    assert out3.shape == (3, 1, 5, 7), out3.shape
    assert bool(jnp.all(out3 == jnp.reshape(x_odd, (3, 1, 5, 7))))

    print("KERNEL_OK")
</pallas_src>

<mosaic_0001>
module attributes {stable_mosaic.version = 11 : i64} {
  func.func @_copy_kernel(%arg0: i32, %arg1: memref<8x256xf32, #tpu.memory_space<vmem>>, %arg2: memref<8x256xf32, #tpu.memory_space<vmem>>) attributes {dimension_semantics = [#tpu.dimension_semantics<parallel>], iteration_bounds = array<i64: 1>, scalar_prefetch = 0 : i64, scratch_operands = 0 : i64, tpu.core_type = #tpu.core_type<tc>, window_params = [{transform_indices = @transform_0, window_bounds = array<i64: 8, 256>}, {transform_indices = @transform_1, window_bounds = array<i64: 8, 256>}]} {
    %c0 = arith.constant 0 : index
    %c0_0 = arith.constant 0 : index
    %0 = vector.load %arg1[%c0, %c0_0] : memref<8x256xf32, #tpu.memory_space<vmem>>, vector<8x256xf32>
    %c0_1 = arith.constant 0 : index
    %c0_2 = arith.constant 0 : index
    %1 = vector.load %arg2[%c0_1, %c0_2] : memref<8x256xf32, #tpu.memory_space<vmem>>, vector<8x256xf32>
    tpu.vector_store %arg2[%c0_1, %c0_2], %0 {strides = array<i32>} : memref<8x256xf32, #tpu.memory_space<vmem>>, vector<8x256xf32>,
    return
  }
  func.func @transform_0(%arg0: i32) -> (i32, i32) {
    %c0_i32 = arith.constant 0 : i32
    %c0_i32_0 = arith.constant 0 : i32
    return %arg0, %c0_i32 : i32, i32
  }
  func.func @transform_1(%arg0: i32) -> (i32, i32) {
    %c0_i32 = arith.constant 0 : i32
    %c0_i32_0 = arith.constant 0 : i32
    return %arg0, %c0_i32 : i32, i32
  }
}

</mosaic_0001>

<llo_original>
// kernel: tpu_custom_call.1
$region0: #{tpu_custom_call.1}
  #allocation0 [shape = 'u32[]', space=smem, size = 0x4, offset = 0x4, fixed_abs, tag = 'smem constant byte address 0x4 - core index']
  #allocation1 [shape = 'u32[144,128]{1,0:T(1,128)}', space=vmem, size = 0x12000, scoped, tag = 'internal scratch']
  %s0 = inlined_call_operand.hbm [shape: f32[8,256], index: 0, kind: input, shape index: {}]
  %s1 = inlined_call_operand.hbm [shape: f32[8,256], index: 1, kind: output, shape index: {}]
  %s2 = sld [smem:[#allocation0]]
  $region18: #{tpu_custom_call.1} parent=0
    _
  %s4 = ssub.s32 1, %s2
  %s5 = scalar_select 0, %s4, %s2
  $region1: #{tpu_custom_call.1} parent=0
    #allocation2 [shape = 'u8[8192]{0}', space=vmem, size = 0x2000, scoped, tag = 'input window, operand 0, single buffered']
    #allocation3 [shape = 's32[1]{0}', space=sflag, size = 0x4, scoped, tag = 'scoped memory for tpu_custom_call.1']
    #allocation4 [shape = 's32[1]{0}', space=sflag, size = 0x4, scoped, tag = 'scoped memory for tpu_custom_call.1']
    #allocation5 [shape = 'u8[8192]{0}', space=vmem, size = 0x2000, scoped, tag = 'output window, operand 0, single buffered']
    %6 = vsyncpa [#allocation3], 0
    %7 = vsyncpa [#allocation4], 0
    // Predicated region
    $region2: #{tpu_custom_call.1} parent=1 // pred_check
      _
    $region3: #{tpu_custom_call.1} parent=1 // pred_check_branch
      %9 = sbr.rel (0) target = $region5
    $region4: #{tpu_custom_call.1} parent=1 // pred_region
      %s11 = ssub.s32 256, 256
      %12 = vsyncadd [#allocation3], %s11
      %s14 = sshll.u32 [#allocation2], 4
      %s15 = int_to_ptr.vmem [resolvable:$true] %s14
      %17 = dma.hbm_to_vmem [thread:$0]  %s0, 256, %s15, [#allocation3]
    $region5: #{tpu_custom_call.1} parent=1 // pred_fallthru
      _
    // Predicated region
    $region6: #{tpu_custom_call.1} parent=1 // pred_check
      _
    $region7: #{tpu_custom_call.1} parent=1 // pred_check_branch
      %19 = sbr.rel (0) target = $region9
    $region8: #{tpu_custom_call.1} parent=1 // pred_region
      %20 = dma.done [#allocation3], 256
    $region9: #{tpu_custom_call.1} parent=1 // pred_fallthru
      _
    %v21 = vld [vmem:[#allocation2] sm:$0xff]
    %v22 = vld [vmem:[#allocation2 + $0x8] sm:$0xff]
    %23 = vst [vmem:[#allocation5] sm:$0xff] %v21
    %24 = vst [vmem:[#allocation5 + $0x8] sm:$0xff] %v22
    // Predicated region
    $region10: #{tpu_custom_call.1} parent=1 // pred_check
      _
    $region11: #{tpu_custom_call.1} parent=1 // pred_check_branch
      %26 = sbr.rel (0) target = $region13
    $region12: #{tpu_custom_call.1} parent=1 // pred_region
      %s28 = ssub.s32 256, 256
      %29 = vsyncadd [#allocation4], %s28
      %s31 = sshll.u32 [#allocation5], 4
      %s32 = int_to_ptr.vmem [resolvable:$true] %s31
      %34 = dma.vmem_to_hbm [thread:$0]  %s32, 256, %s1, [#allocation4]
    $region13: #{tpu_custom_call.1} parent=1 // pred_fallthru
      _
    // Predicated region
    $region14: #{tpu_custom_call.1} parent=1 // pred_check
      _
    $region15: #{tpu_custom_call.1} parent=1 // pred_check_branch
      %36 = sbr.rel (0) target = $region17
    $region16: #{tpu_custom_call.1} parent=1 // pred_region
      %37 = dma.done [#allocation4], 256
    $region17: #{tpu_custom_call.1} parent=1 // pred_fallthru
      _
    %38 = vsyncpa [#allocation3], 1
    %39 = vsyncpa [#allocation4], 1

</llo_original>
